<compile_context>
chip_gen: v7x
topology: tpu7x:2x2x1
jax: 0.10.0
libtpu: 0.0.40
codegen_flags: <defaults>
</compile_context>

<pallas_src>
import functools

import jax
import jax.numpy as jnp
from jax import lax
from jax.experimental import pallas as pl
from jax.experimental.pallas import tpu as pltpu

LANES = 128
SUBLANES = 8
VREG = SUBLANES * LANES        # 1024 elements = one f32 vreg
PAD_PRED = -200.0              # exp(-200) == 0 in f32 -> bce == 0 exactly


def _bce_blur_kernel(pred_ref, true_ref, out_ref, acc_ref, *,
                     alpha, n_valid, block_rows, blocks_per_split, needs_mask):
    i = pl.program_id(1)

    @pl.when(i == 0)
    def _():
        acc_ref[...] = jnp.zeros_like(acc_ref)

    x = pred_ref[...].astype(jnp.float32)
    y = true_ref[...].astype(jnp.float32)

    if needs_mask:
        # Logical element index of each slot in this block; anything at or
        # beyond n_valid (partial last block, padded lanes, or clamped
        # duplicate blocks) is forced to (PAD_PRED, 0) BEFORE the
        # transcendentals, which makes its bce (and hence its contribution)
        # exactly 0. Garbage/NaN in the OOB region never reaches the math.
        block_idx = pl.program_id(0) * blocks_per_split + i
        row0 = block_idx * block_rows
        gr = row0 + lax.broadcasted_iota(jnp.int32, (block_rows, LANES), 0)
        lane = lax.broadcasted_iota(jnp.int32, (block_rows, LANES), 1)
        full_rows = n_valid // LANES
        rem = n_valid % LANES
        valid = gr < full_rows
        if rem:
            valid = valid | ((gr == full_rows) & (lane < rem))
        x = jnp.where(valid, x, PAD_PRED)
        y = jnp.where(valid, y, 0.0)

    # Shared exponential: e = exp(-|x|) feeds both the BCE log term and the
    # sigmoid (2 EUP exp issues per element total, incl. the blur exp).
    e = jnp.exp(-jnp.abs(x))

    # Numerically stable BCE with logits (PyTorch formulation):
    #   max(x, 0) - x*y + log(1 + exp(-|x|))
    bce = jnp.maximum(x, 0.0) - x * y + jnp.log1p(e)

    # sigmoid(x) = where(x>=0, 1, e) / (1+e), with the divide replaced by an
    # approx EUP reciprocal + Newton-Raphson refinements on the VPU (which
    # has slack here); two NR steps keep p at ~f32 accuracy regardless of the
    # raw vrcp precision, so the blur exp's ~20x sensitivity to dx is safe.
    d = 1.0 + e
    r = pl.reciprocal(d, approx=True)
    r = r * (2.0 - d * r)
    r = r * (2.0 - d * r)
    p = jnp.where(x >= 0.0, r, e * r)

    dx = p - y
    alpha_factor = 1.0 - jnp.exp((dx - 1.0) / (alpha + 1e-4))

    # Fold the (br, 128) contribution into a single (8, 128) vreg accumulator
    # with a pure VPU tree-add: one vreg's worth of stores per step instead
    # of br/8 (v5e/v6e have a single vector-store slot per bundle).
    contrib = bce * alpha_factor
    acc_ref[...] += contrib.reshape(
        block_rows // SUBLANES, SUBLANES, LANES).sum(axis=0)

    @pl.when(i == pl.num_programs(1) - 1)
    def _():
        out_ref[...] = acc_ref[...].reshape(1, SUBLANES, LANES)


def bce_blur_with_logits_loss(pred, true, alpha=0.05, block_rows=2048):
    """Pallas implementation of BCEBlurWithLogitsLoss.forward -> scalar mean."""
    assert pred.shape == true.shape
    n = pred.size

    pf = pred.reshape(-1)
    tf = true.reshape(-1)

    # Flatten to (rows, 128) with rows a multiple of 8. When n is already a
    # multiple of one vreg (the common case, incl. the test shape) this is a
    # free metadata reshape — no extra HBM pass. Ragged sizes fall back to a
    # tiny (<1024-element) pad; the kernel masks by element index so the pad
    # values are irrelevant.
    pad = (-n) % VREG
    if pad:
        pf = jnp.pad(pf, (0, pad))
        tf = jnp.pad(tf, (0, pad))
    rows = (n + pad) // LANES
    pf = pf.reshape(rows, LANES)
    tf = tf.reshape(rows, LANES)

    # Block height: multiple of 8 sublanes, as large as possible so per-step
    # DMA (>= ~1 MiB/input at br=2048) dwarfs the ~0.35us grid-step overhead.
    br = min(max(SUBLANES, (block_rows // SUBLANES) * SUBLANES), rows)
    nb = -(-rows // br)

    # Leading 2-way "parallel" axis: shardable across TensorCores on dual-TC
    # parts; a harmless serial outer loop of length 2 elsewhere.
    n_splits = 2 if nb >= 2 else 1
    bps = -(-nb // n_splits)

    needs_mask = (rows * LANES != n) or (nb * br != rows) or (n_splits * bps != nb)

    def in_index(c, i):
        # Clamp so "extra" blocks (when nb doesn't split evenly) re-read the
        # last real block; the kernel mask zeroes their contribution.
        return (jnp.minimum(c * bps + i, nb - 1), 0)

    kernel = functools.partial(
        _bce_blur_kernel, alpha=alpha, n_valid=n, block_rows=br,
        blocks_per_split=bps, needs_mask=needs_mask)

    partials = pl.pallas_call(
        kernel,
        out_shape=jax.ShapeDtypeStruct((n_splits, SUBLANES, LANES), jnp.float32),
        grid_spec=pltpu.PrefetchScalarGridSpec(
            num_scalar_prefetch=0,
            grid=(n_splits, bps),
            in_specs=[
                pl.BlockSpec((br, LANES), in_index),
                pl.BlockSpec((br, LANES), in_index),
            ],
            out_specs=pl.BlockSpec((1, SUBLANES, LANES), lambda c, i: (c, 0, 0)),
            scratch_shapes=[pltpu.VMEM((SUBLANES, LANES), jnp.float32)],
        ),
        compiler_params=pltpu.CompilerParams(
            dimension_semantics=(pltpu.PARALLEL, pltpu.ARBITRARY),
            vmem_limit_bytes=32 * 1024 * 1024,
        ),
    )(pf, tf)

    return jnp.sum(partials) / jnp.float32(n)


def _reference(pred, true, alpha=0.05):
    x = pred.astype(jnp.float32)
    y = true.astype(jnp.float32)
    bce = jnp.maximum(x, 0.0) - x * y + jnp.log1p(jnp.exp(-jnp.abs(x)))
    p = jax.nn.sigmoid(x)
    dx = p - y
    af = 1.0 - jnp.exp((dx - 1.0) / (alpha + 1e-4))
    return jnp.mean(bce * af)


if __name__ == "__main__":
    key = jax.random.PRNGKey(0)
    k1, k2 = jax.random.split(key)

    # NCHW, same convention as the PyTorch module's typical YOLO usage.
    pred = jax.random.normal(k1, (2, 4, 16, 16), dtype=jnp.float32)
    true = (jax.random.uniform(k2, (2, 4, 16, 16)) > 0.5).astype(jnp.float32)

    out = jax.block_until_ready(bce_blur_with_logits_loss(pred, true, alpha=0.05))
    ref = jax.block_until_ready(_reference(pred, true, alpha=0.05))

    assert jnp.allclose(out, ref, rtol=1e-5, atol=1e-6), (out, ref)
    print("KERNEL_OK")
</pallas_src>

<mosaic_0001>
module attributes {stable_mosaic.version = 11 : i64} {
  func.func @_bce_blur_kernel(%arg0: i32, %arg1: i32, %arg2: memref<16x128xf32, #tpu.memory_space<vmem>>, %arg3: memref<16x128xf32, #tpu.memory_space<vmem>>, %arg4: memref<1x8x128xf32, #tpu.memory_space<vmem>>, %arg5: memref<8x128xf32, #tpu.memory_space<vmem>>) attributes {dimension_semantics = [#tpu.dimension_semantics<parallel>, #tpu.dimension_semantics<arbitrary>], iteration_bounds = array<i64: 1, 1>, scalar_prefetch = 0 : i64, scratch_operands = 1 : i64, tpu.core_type = #tpu.core_type<tc>, window_params = [{transform_indices = @transform_0, window_bounds = array<i64: 16, 128>}, {transform_indices = @transform_1, window_bounds = array<i64: 16, 128>}, {transform_indices = @transform_2, window_bounds = array<i64: 1, 8, 128>}]} {
    %c0_i32 = arith.constant 0 : i32
    %0 = arith.cmpi eq, %arg1, %c0_i32 : i32
    %1 = arith.extui %0 : i1 to i32
    %c0_i32_0 = arith.constant 0 : i32
    %2 = arith.cmpi ne, %1, %c0_i32_0 : i32
    scf.if %2 {
      %cst_19 = arith.constant 0.000000e+00 : f32
      %47 = vector.broadcast %cst_19 : f32 to vector<8x128xf32>
      %c0_20 = arith.constant 0 : index
      %c0_21 = arith.constant 0 : index
      %48 = vector.load %arg5[%c0_20, %c0_21] : memref<8x128xf32, #tpu.memory_space<vmem>>, vector<8x128xf32>
      tpu.vector_store %arg5[%c0_20, %c0_21], %47 {strides = array<i32>} : memref<8x128xf32, #tpu.memory_space<vmem>>, vector<8x128xf32>,
    } else {
    }
    %c0 = arith.constant 0 : index
    %c0_1 = arith.constant 0 : index
    %3 = vector.load %arg2[%c0, %c0_1] : memref<16x128xf32, #tpu.memory_space<vmem>>, vector<16x128xf32>
    %c0_2 = arith.constant 0 : index
    %c0_3 = arith.constant 0 : index
    %4 = vector.load %arg3[%c0_2, %c0_3] : memref<16x128xf32, #tpu.memory_space<vmem>>, vector<16x128xf32>
    %5 = math.absf %3 : vector<16x128xf32>
    %cst = arith.constant 0.000000e+00 : f32
    %6 = vector.broadcast %cst : f32 to vector<16x128xf32>
    %7 = arith.subf %6, %5 : vector<16x128xf32>
    %8 = math.exp %7 : vector<16x128xf32>
    %cst_4 = arith.constant 0.000000e+00 : f32
    %9 = vector.broadcast %cst_4 : f32 to vector<16x128xf32>
    %10 = arith.maximumf %3, %9 : vector<16x128xf32>
    %11 = arith.mulf %3, %4 : vector<16x128xf32>
    %12 = arith.subf %10, %11 : vector<16x128xf32>
    %13 = math.log1p %8 : vector<16x128xf32>
    %14 = arith.addf %12, %13 : vector<16x128xf32>
    %cst_5 = arith.constant 1.000000e+00 : f32
    %15 = vector.broadcast %cst_5 : f32 to vector<16x128xf32>
    %16 = arith.addf %15, %8 : vector<16x128xf32>
    %17 = tpu.reciprocal %16 {approx = true} : vector<16x128xf32> -> vector<16x128xf32>
    %18 = arith.mulf %16, %17 : vector<16x128xf32>
    %cst_6 = arith.constant 2.000000e+00 : f32
    %19 = vector.broadcast %cst_6 : f32 to vector<16x128xf32>
    %20 = arith.subf %19, %18 : vector<16x128xf32>
    %21 = arith.mulf %17, %20 : vector<16x128xf32>
    %22 = arith.mulf %16, %21 : vector<16x128xf32>
    %cst_7 = arith.constant 2.000000e+00 : f32
    %23 = vector.broadcast %cst_7 : f32 to vector<16x128xf32>
    %24 = arith.subf %23, %22 : vector<16x128xf32>
    %25 = arith.mulf %21, %24 : vector<16x128xf32>
    %cst_8 = arith.constant 0.000000e+00 : f32
    %26 = vector.broadcast %cst_8 : f32 to vector<16x128xf32>
    %27 = arith.cmpf oge, %3, %26 : vector<16x128xf32>
    %28 = arith.mulf %8, %25 : vector<16x128xf32>
    %29 = arith.select %27, %25, %28 : vector<16x128xi1>, vector<16x128xf32>
    %30 = arith.subf %29, %4 : vector<16x128xf32>
    %cst_9 = arith.constant 1.000000e+00 : f32
    %31 = vector.broadcast %cst_9 : f32 to vector<16x128xf32>
    %32 = arith.subf %30, %31 : vector<16x128xf32>
    %cst_10 = arith.constant 5.010000e-02 : f32
    %33 = vector.broadcast %cst_10 : f32 to vector<16x128xf32>
    %34 = arith.divf %32, %33 : vector<16x128xf32>
    %35 = math.exp %34 : vector<16x128xf32>
    %cst_11 = arith.constant 1.000000e+00 : f32
    %36 = vector.broadcast %cst_11 : f32 to vector<16x128xf32>
    %37 = arith.subf %36, %35 : vector<16x128xf32>
    %38 = arith.mulf %14, %37 : vector<16x128xf32>
    %c0_12 = arith.constant 0 : index
    %c0_13 = arith.constant 0 : index
    %39 = vector.load %arg5[%c0_12, %c0_13] : memref<8x128xf32, #tpu.memory_space<vmem>>, vector<8x128xf32>
    %40 = vector.shape_cast %38 : vector<16x128xf32> to vector<2x8x128xf32>
    %cst_14 = arith.constant dense<0.000000e+00> : vector<8x128xf32>
    %41 = vector.multi_reduction <add>, %40, %cst_14 [0] : vector<2x8x128xf32> to vector<8x128xf32>
    %42 = arith.addf %39, %41 : vector<8x128xf32>
    %c0_15 = arith.constant 0 : index
    %c0_16 = arith.constant 0 : index
    %43 = vector.load %arg5[%c0_15, %c0_16] : memref<8x128xf32, #tpu.memory_space<vmem>>, vector<8x128xf32>
    tpu.vector_store %arg5[%c0_15, %c0_16], %42 {strides = array<i32>} : memref<8x128xf32, #tpu.memory_space<vmem>>, vector<8x128xf32>,
    %c0_i32_17 = arith.constant 0 : i32
    %44 = arith.cmpi eq, %arg1, %c0_i32_17 : i32
    %45 = arith.extui %44 : i1 to i32
    %c0_i32_18 = arith.constant 0 : i32
    %46 = arith.cmpi ne, %45, %c0_i32_18 : i32
    scf.if %46 {
      %c0_19 = arith.constant 0 : index
      %c0_20 = arith.constant 0 : index
      %47 = vector.load %arg5[%c0_19, %c0_20] : memref<8x128xf32, #tpu.memory_space<vmem>>, vector<8x128xf32>
      %48 = vector.shape_cast %47 : vector<8x128xf32> to vector<1x8x128xf32>
      %c0_21 = arith.constant 0 : index
      %c0_22 = arith.constant 0 : index
      %c0_23 = arith.constant 0 : index
      %49 = vector.load %arg4[%c0_21, %c0_22, %c0_23] : memref<1x8x128xf32, #tpu.memory_space<vmem>>, vector<1x8x128xf32>
      tpu.vector_store %arg4[%c0_21, %c0_22, %c0_23], %48 {strides = array<i32>} : memref<1x8x128xf32, #tpu.memory_space<vmem>>, vector<1x8x128xf32>,
    } else {
    }
    return
  }
  func.func @transform_0(%arg0: i32, %arg1: i32) -> (i32, i32) {
    %c1_i32 = arith.constant 1 : i32
    %0 = arith.muli %arg0, %c1_i32 : i32
    %1 = arith.addi %0, %arg1 : i32
    %c0_i32 = arith.constant 0 : i32
    %2 = arith.minsi %1, %c0_i32 : i32
    %c0_i32_0 = arith.constant 0 : i32
    %c0_i32_1 = arith.constant 0 : i32
    return %2, %c0_i32_0 : i32, i32
  }
  func.func @transform_1(%arg0: i32, %arg1: i32) -> (i32, i32) {
    %c1_i32 = arith.constant 1 : i32
    %0 = arith.muli %arg0, %c1_i32 : i32
    %1 = arith.addi %0, %arg1 : i32
    %c0_i32 = arith.constant 0 : i32
    %2 = arith.minsi %1, %c0_i32 : i32
    %c0_i32_0 = arith.constant 0 : i32
    %c0_i32_1 = arith.constant 0 : i32
    return %2, %c0_i32_0 : i32, i32
  }
  func.func @transform_2(%arg0: i32, %arg1: i32) -> (i32, i32, i32) {
    %c0_i32 = arith.constant 0 : i32
    %c0_i32_0 = arith.constant 0 : i32
    %c0_i32_1 = arith.constant 0 : i32
    return %arg0, %c0_i32, %c0_i32_0 : i32, i32, i32
  }
}

</mosaic_0001>

<llo_original>
// kernel: tpu_custom_call.1
$region0: #{tpu_custom_call.1}
  #allocation0 [shape = 'u32[]', space=smem, size = 0x4, offset = 0x4, fixed_abs, tag = 'smem constant byte address 0x4 - core index']
  #allocation1 [shape = 'u32[144,128]{1,0:T(1,128)}', space=vmem, size = 0x12000, scoped, tag = 'internal scratch']
  #allocation2 [shape = 'f32[8,128]{1,0:T(8,128)}', space=vmem, size = 0x1000, scoped, tag = 'scratch operand']
  %s0 = inlined_call_operand.hbm [shape: f32[16,128], index: 0, kind: input, shape index: {}]
  %s1 = inlined_call_operand.hbm [shape: f32[16,128], index: 1, kind: input, shape index: {}]
  %s2 = inlined_call_operand.hbm [shape: f32[1,8,128], index: 2, kind: output, shape index: {}]
  %s3 = sld [smem:[#allocation0]]
  $region34: #{tpu_custom_call.1} parent=0
    _
  %s5 = ssub.s32 1, %s3
  %s6 = scalar_select 0, %s5, %s3
  $region1: #{tpu_custom_call.1} parent=0
    #allocation3 [shape = 'u8[8192]{0}', space=vmem, size = 0x2000, scoped, tag = 'input window, operand 0, single buffered']
    #allocation4 [shape = 's32[1]{0}', space=sflag, size = 0x4, scoped, tag = 'scoped memory for tpu_custom_call.1']
    #allocation5 [shape = 's32[1]{0}', space=sflag, size = 0x4, scoped, tag = 'scoped memory for tpu_custom_call.1']
    #allocation6 [shape = 'u8[8192]{0}', space=vmem, size = 0x2000, scoped, tag = 'input window, operand 1, single buffered']
    #allocation7 [shape = 's32[1]{0}', space=sflag, size = 0x4, scoped, tag = 'scoped memory for tpu_custom_call.1']
    #allocation8 [shape = 'u8[4096]{0}', space=vmem, size = 0x1000, scoped, tag = 'output window, operand 0, single buffered']
    %7 = vsyncpa [#allocation4], 0
    %8 = vsyncpa [#allocation7], 0
    %9 = vsyncpa [#allocation5], 0
    // Predicated region
    $region2: #{tpu_custom_call.1} parent=1 // pred_check
      _
    $region3: #{tpu_custom_call.1} parent=1 // pred_check_branch
      %11 = sbr.rel (0) target = $region5
    $region4: #{tpu_custom_call.1} parent=1 // pred_region
      %s12 = sadd.s32 0, 0
      %p13 = scmp.lt.s32.totalorder %s12, 0
      %s14 = scalar_select %p13, %s12, 0
      %s15 = smul.u32 2, %s14
      %s17 = ssub.s32 256, 256
      %18 = vsyncadd [#allocation4], %s17
      %s19 = smul.addr %s15, 128
      %s20 = scalar_lea.hbm %s0, %s19
      %s21 = sshll.u32 [#allocation3], 4
      %s22 = int_to_ptr.vmem [resolvable:$true] %s21
      %27 = dma.hbm_to_vmem [thread:$0]  %s20, 256, %s22, [#allocation4], 128, 128, 8
    $region5: #{tpu_custom_call.1} parent=1 // pred_fallthru
      _
    // Predicated region
    $region6: #{tpu_custom_call.1} parent=1 // pred_check
      _
    $region7: #{tpu_custom_call.1} parent=1 // pred_check_branch
      %29 = sbr.rel (0) target = $region9
    $region8: #{tpu_custom_call.1} parent=1 // pred_region
      %s30 = sadd.s32 0, 0
      %p31 = scmp.lt.s32.totalorder %s30, 0
      %s32 = scalar_select %p31, %s30, 0
      %s33 = smul.u32 2, %s32
      %s35 = ssub.s32 256, 256
      %36 = vsyncadd [#allocation7], %s35
      %s37 = smul.addr %s33, 128
      %s38 = scalar_lea.hbm %s1, %s37
      %s39 = sshll.u32 [#allocation6], 4
      %s40 = int_to_ptr.vmem [resolvable:$true] %s39
      %45 = dma.hbm_to_vmem [thread:$0]  %s38, 256, %s40, [#allocation7], 128, 128, 8
    $region9: #{tpu_custom_call.1} parent=1 // pred_fallthru
      _
    // Predicated region
    $region10: #{tpu_custom_call.1} parent=1 // pred_check
      _
    $region11: #{tpu_custom_call.1} parent=1 // pred_check_branch
      %47 = sbr.rel (0) target = $region13
    $region12: #{tpu_custom_call.1} parent=1 // pred_region
      %48 = dma.done [#allocation4], 256
    $region13: #{tpu_custom_call.1} parent=1 // pred_fallthru
      _
    // Predicated region
    $region14: #{tpu_custom_call.1} parent=1 // pred_check
      _
    $region15: #{tpu_custom_call.1} parent=1 // pred_check_branch
      %50 = sbr.rel (0) target = $region17
    $region16: #{tpu_custom_call.1} parent=1 // pred_region
      %51 = dma.done [#allocation7], 256
    $region17: #{tpu_custom_call.1} parent=1 // pred_fallthru
      _
    %s52 = sadd.s32 0, 0
    %p53 = scmp.lt.s32.totalorder %s52, 0
    %s54 = scalar_select %p53, %s52, 0
    %s55 = smul.u32 2, %s54
    %s56 = sadd.s32 0, 0
    %p57 = scmp.lt.s32.totalorder %s56, 0
    %s58 = scalar_select %p57, %s56, 0
    %s59 = smul.u32 2, %s58
    %p60 = scmp.eq.s32.totalorder 0, 0
    // Predicated region
    $region18: #{tpu_custom_call.1} parent=1 // pred_check
      %p61 = pneg %p60
    $region19: #{tpu_custom_call.1} parent=1 // pred_check_branch
      %63 = sbr.rel (%p61) target = $region21
    $region20: #{tpu_custom_call.1} parent=1 // pred_region
      %64 = vst [vmem:[#allocation2] sm:$0xff] 0.0
    $region21: #{tpu_custom_call.1} parent=1 // pred_fallthru
      _
    %v65 = vld [vmem:[#allocation3] sm:$0xff]
    %v66 = vld [vmem:[#allocation3 + $0x8] sm:$0xff]
    %v67 = vld [vmem:[#allocation6] sm:$0xff]
    %v68 = vld [vmem:[#allocation6 + $0x8] sm:$0xff]
    %v69 = vand.u32 2147483647, %v65
    %v70 = vand.u32 2147483647, %v66
    %v71 = vsub.f32 0.0, %v69
    %v72 = vsub.f32 0.0, %v70
    %v73 = vmul.f32 %v71, 1.442695
    %v74 = vpow.pop %v73
    %v75 = vmul.f32 %v72, 1.442695
    %v76 = vpow.pop %v75
    %v77 = vmax.f32 %v65, 0.0
    %v78 = vmax.f32 %v66, 0.0
    %v79 = vmul.f32 %v65, %v67
    %v80 = vmul.f32 %v66, %v68
    %v81 = vsub.f32 %v77, %v79
    %v82 = vsub.f32 %v78, %v80
    %v83 = vadd.f32 %v74, 1.0
    %v84 = vlog2.pop %v83
    %v85 = vmul.f32 %v84, 0.6931472
    %v86 = vmul.f32 -0.5, %v74
    %v87 = vadd.f32 %v86, 1.0
    %v88 = vmul.f32 %v87, %v74
    %v89 = vand.u32 2147483647, %v74
    %vm90 = vcmp.lt.f32.partialorder %v89, 0.0004427343
    %v91 = vsel %vm90, %v88, %v85
    %v92 = vadd.f32 %v76, 1.0
    %v93 = vlog2.pop %v92
    %v94 = vmul.f32 %v93, 0.6931472
    %v95 = vmul.f32 -0.5, %v76
    %v96 = vadd.f32 %v95, 1.0
    %v97 = vmul.f32 %v96, %v76
    %v98 = vand.u32 2147483647, %v76
    %vm99 = vcmp.lt.f32.partialorder %v98, 0.0004427343
    %v100 = vsel %vm99, %v97, %v94
    %v101 = vadd.f32 %v81, %v91
    %v102 = vadd.f32 %v82, %v100
    %v103 = vadd.f32 %v74, 1.0
    %v104 = vadd.f32 %v76, 1.0
    %v105 = vrcp.pop %v103
    %v106 = vrcp.pop %v104
    %v107 = vmul.f32 %v103, %v105
    %v108 = vmul.f32 %v104, %v106
    %v109 = vsub.f32 2.0, %v107
    %v110 = vsub.f32 2.0, %v108
    %v111 = vmul.f32 %v105, %v109
    %v112 = vmul.f32 %v106, %v110
    %v113 = vmul.f32 %v103, %v111
    %v114 = vmul.f32 %v104, %v112
    %v115 = vsub.f32 2.0, %v113
    %v116 = vsub.f32 2.0, %v114
    %v117 = vmul.f32 %v111, %v115
    %v118 = vmul.f32 %v112, %v116
    %vm119 = vcmp.ge.f32.partialorder %v65, 0.0
    %vm120 = vcmp.ge.f32.partialorder %v66, 0.0
    %v121 = vmul.f32 %v74, %v117
    %v122 = vmul.f32 %v76, %v118
    %v123 = vsel %vm119, %v117, %v121
    %v124 = vsel %vm120, %v118, %v122
    %v125 = vsub.f32 %v123, %v67
    %v126 = vsub.f32 %v124, %v68
    %v127 = vsub.f32 %v125, 1.0
    %v128 = vsub.f32 %v126, 1.0
    %v129 = vrcp.pop 0.0501
    %v130 = vmul.f32 %v127, %v129
    %v131 = vmul.f32 %v128, %v129
    %v132 = vmul.f32 %v130, 1.442695
    %v133 = vpow.pop %v132
    %v134 = vmul.f32 %v131, 1.442695
    %v135 = vpow.pop %v134
    %v136 = vsub.f32 1.0, %v133
    %v137 = vsub.f32 1.0, %v135
    %v138 = vmul.f32 %v101, %v136
    %v139 = vmul.f32 %v102, %v137
    %v140 = vld [vmem:[#allocation2] sm:$0xff]
    %v141 = vadd.f32 %v138, %v139
    %v142 = vadd.f32 %v140, %v141
    %143 = vst [vmem:[#allocation2] sm:$0xff] %v142
    // Predicated region
    $region22: #{tpu_custom_call.1} parent=1 // pred_check
      %p144 = pneg %p60
    $region23: #{tpu_custom_call.1} parent=1 // pred_check_branch
      %146 = sbr.rel (%p144) target = $region25
    $region24: #{tpu_custom_call.1} parent=1 // pred_region
      %v147 = vld [vmem:[#allocation2] sm:$0xff]
      %148 = vst [vmem:[#allocation8] sm:$0xff] %v147
    $region25: #{tpu_custom_call.1} parent=1 // pred_fallthru
      _
    // Predicated region
    $region26: #{tpu_custom_call.1} parent=1 // pred_check
      _
    $region27: #{tpu_custom_call.1} parent=1 // pred_check_branch
      %150 = sbr.rel (0) target = $region29
    $region28: #{tpu_custom_call.1} parent=1 // pred_region
      %s152 = ssub.s32 128, 128
      %153 = vsyncadd [#allocation5], %s152
      %s155 = sshll.u32 [#allocation8], 4
      %s156 = int_to_ptr.vmem [resolvable:$true] %s155
      %158 = dma.vmem_to_hbm [thread:$0]  %s156, 128, %s2, [#allocation5]
    $region29: #{tpu_custom_call.1} parent=1 // pred_fallthru
      _
    // Predicated region
    $region30: #{tpu_custom_call.1} parent=1 // pred_check
      _
    $region31: #{tpu_custom_call.1} parent=1 // pred_check_branch
      %160 = sbr.rel (0) target = $region33
    $region32: #{tpu_custom_call.1} parent=1 // pred_region
      %161 = dma.done [#allocation5], 128
    $region33: #{tpu_custom_call.1} parent=1 // pred_fallthru
      _
    %162 = vsyncpa [#allocation4], 1
    %163 = vsyncpa [#allocation7], 1
    %164 = vsyncpa [#allocation5], 1

</llo_original>
